<compile_context>
chip_gen: v7x
topology: tpu7x:2x2x1
jax: 0.10.0
libtpu: 0.0.40
codegen_flags: <defaults>
</compile_context>

<pallas_src>
import math

import jax
import jax.numpy as jnp
from jax.experimental import pallas as pl
from jax.experimental.pallas import tpu as pltpu

NEURONS = 32


def _round_up(v, m):
    return ((v + m - 1) // m) * m


# ----------------------------------------------------------------------------
# Pallas kernel: full MLP forward for one batch tile, transposed layout.
#   x_ref, t_ref : (1, TN)     out_ref : (1, TN)
#   w1 (32, 2)  b1 (32, 1)   w2 (32, 32) b2 (32, 1)
#   w3 (32, 32) b3 (32, 1)   w4 (1, 32)  b4 (1, 1)
# ----------------------------------------------------------------------------
def _mlp_kernel(x_ref, t_ref, w1_ref, b1_ref, w2_ref, b2_ref,
                w3_ref, b3_ref, w4_ref, b4_ref, out_ref):
    x = x_ref[...]                                          # (1, TN)
    t = t_ref[...]                                          # (1, TN)
    w1 = w1_ref[...]                                        # (32, 2)

    # Layer 1: K=2 contraction -> two VPU broadcast FMAs (skip the MXU).
    h = jnp.tanh(w1[:, 0:1] * x + w1[:, 1:2] * t + b1_ref[...])     # (32, TN)

    # Layers 2, 3: (32,32) @ (32, TN) on the MXU, f32 accumulation.
    h = jnp.tanh(
        jnp.dot(w2_ref[...], h, preferred_element_type=jnp.float32)
        + b2_ref[...])                                               # (32, TN)
    h = jnp.tanh(
        jnp.dot(w3_ref[...], h, preferred_element_type=jnp.float32)
        + b3_ref[...])                                               # (32, TN)

    # Output layer: (1,32) @ (32, TN) -> lane-dense (1, TN).
    z = (jnp.dot(w4_ref[...], h, preferred_element_type=jnp.float32)
         + b4_ref[...])                                              # (1, TN)

    # softplus with PyTorch's beta=1, threshold=20 semantics.
    out_ref[...] = jnp.where(z > 20.0, z,
                             jnp.log1p(jnp.exp(jnp.minimum(z, 20.0))))


def net_forward(x, t, params):
    """x: (N, 1) f32, t: (N, 1) f32 -> (N, 1) f32."""
    n = x.shape[0]

    # Batch tile: multiple of 128 lanes, capped at 4096 so the per-layer
    # (32, TN) f32 intermediates (<= 512 KiB) plus double-buffered I/O rows
    # stay far below every chip's scoped-VMEM default.
    tile_n = min(4096, _round_up(max(n, 1), 128))
    n_pad = _round_up(n, tile_n)
    grid = (n_pad // tile_n,)

    # Batch on lanes: x and t become (1, N_pad) rows (zero-padded tail lanes;
    # tanh/softplus of the padded zeros are finite and sliced off below).
    xr = jnp.pad(x[:, 0].astype(jnp.float32), (0, n_pad - n)).reshape(1, n_pad)
    tr = jnp.pad(t[:, 0].astype(jnp.float32), (0, n_pad - n)).reshape(1, n_pad)

    (w1, b1), (w2, b2), (w3, b3), (w4, b4) = params     # PyTorch (out, in)
    b1c = b1.reshape(-1, 1)
    b2c = b2.reshape(-1, 1)
    b3c = b3.reshape(-1, 1)
    b4c = b4.reshape(-1, 1)

    row_spec = pl.BlockSpec((1, tile_n), lambda i: (0, i))

    def resident(arr):
        # Full-array block, constant index map -> fetched once, kept resident.
        return pl.BlockSpec(arr.shape, lambda i: (0, 0))

    out_row = pl.pallas_call(
        _mlp_kernel,
        out_shape=jax.ShapeDtypeStruct((1, n_pad), jnp.float32),
        grid=grid,
        in_specs=[
            row_spec,             # x
            row_spec,             # t
            resident(w1), resident(b1c),
            resident(w2), resident(b2c),
            resident(w3), resident(b3c),
            resident(w4), resident(b4c),
        ],
        out_specs=row_spec,
        compiler_params=pltpu.CompilerParams(
            dimension_semantics=("parallel",)),
    )(xr, tr, w1, b1c, w2, b2c, w3, b3c, w4, b4c)

    # Layout plumbing back to the module's (N, 1) output lives in the wrapper.
    return out_row[0, :n].reshape(n, 1)


# ----------------------------------------------------------------------------
# Deterministic parameter construction (mirrors the PyTorch __init__).
# ----------------------------------------------------------------------------
def _xavier_uniform(key, out_f, in_f):
    bound = math.sqrt(6.0 / (in_f + out_f))
    return jax.random.uniform(key, (out_f, in_f), jnp.float32, -bound, bound)


def _default_bias(key, out_f, in_f):
    bound = 1.0 / math.sqrt(in_f)
    return jax.random.uniform(key, (out_f,), jnp.float32, -bound, bound)


def _spectral_normalize(key, w, n_power_iterations=1, eps=1e-12):
    """One-step power iteration, as PyTorch spectral_norm does per forward."""
    # TODO(synk): PyTorch persists the power-iteration vector u across forward
    # passes; here u is freshly sampled once at parameter-construction time.
    out_f, in_f = w.shape
    u = jax.random.normal(key, (out_f,), jnp.float32)
    u = u / (jnp.linalg.norm(u) + eps)
    v = jnp.zeros((in_f,), jnp.float32)
    for _ in range(n_power_iterations):
        v = w.T @ u
        v = v / (jnp.linalg.norm(v) + eps)
        u = w @ v
        u = u / (jnp.linalg.norm(u) + eps)
    sigma = u @ (w @ v)
    return w / sigma


def make_params(key):
    ks = jax.random.split(key, 10)

    # PyTorch-layout weights (out, in)
    w1 = _xavier_uniform(ks[0], NEURONS, 2)
    b1 = _default_bias(ks[1], NEURONS, 2)
    w2 = _xavier_uniform(ks[2], NEURONS, NEURONS)
    b2 = _default_bias(ks[3], NEURONS, NEURONS)
    w3 = _xavier_uniform(ks[4], NEURONS, NEURONS)
    b3 = _default_bias(ks[5], NEURONS, NEURONS)
    w4 = _xavier_uniform(ks[6], 1, NEURONS)
    b4 = _default_bias(ks[7], 1, NEURONS)

    # spectral_norm on layers 1 and 2
    w1 = _spectral_normalize(ks[8], w1)
    w2 = _spectral_normalize(ks[9], w2)

    # keep PyTorch (out, in) layout — kernel computes h = W @ h
    return ((w1, b1), (w2, b2), (w3, b3), (w4, b4))


def reference_forward(x, t, params):
    """Pure-JAX reference used for a correctness check."""
    h = jnp.concatenate([x, t], axis=1).astype(jnp.float32)
    (w1, b1), (w2, b2), (w3, b3), (w4, b4) = params
    h = jnp.tanh(h @ w1.T + b1)
    h = jnp.tanh(h @ w2.T + b2)
    h = jnp.tanh(h @ w3.T + b3)
    z = h @ w4.T + b4
    return jnp.where(z > 20.0, z, jnp.log1p(jnp.exp(jnp.minimum(z, 20.0))))


if __name__ == "__main__":
    key = jax.random.PRNGKey(0)
    k_params, k_x, k_t = jax.random.split(key, 3)

    params = make_params(k_params)

    N = 8  # small batch of (x, t) collocation points
    x = jax.random.uniform(k_x, (N, 1), jnp.float32)
    t = jax.random.uniform(k_t, (N, 1), jnp.float32)

    out = net_forward(x, t, params)
    out = jax.block_until_ready(out)

    ref = reference_forward(x, t, params)
    assert out.shape == (N, 1)
    assert jnp.allclose(out, ref, atol=1e-5, rtol=1e-5)

    print("KERNEL_OK")
</pallas_src>

<mosaic_0001>
module attributes {stable_mosaic.version = 11 : i64} {
  func.func @_mlp_kernel(%arg0: i32, %arg1: memref<1x128xf32, #tpu.memory_space<vmem>>, %arg2: memref<1x128xf32, #tpu.memory_space<vmem>>, %arg3: memref<32x2xf32, #tpu.memory_space<vmem>>, %arg4: memref<32x1xf32, #tpu.memory_space<vmem>>, %arg5: memref<32x32xf32, #tpu.memory_space<vmem>>, %arg6: memref<32x1xf32, #tpu.memory_space<vmem>>, %arg7: memref<32x32xf32, #tpu.memory_space<vmem>>, %arg8: memref<32x1xf32, #tpu.memory_space<vmem>>, %arg9: memref<1x32xf32, #tpu.memory_space<vmem>>, %arg10: memref<1x1xf32, #tpu.memory_space<vmem>>, %arg11: memref<1x128xf32, #tpu.memory_space<vmem>>) attributes {dimension_semantics = [#tpu.dimension_semantics<parallel>], iteration_bounds = array<i64: 1>, scalar_prefetch = 0 : i64, scratch_operands = 0 : i64, tpu.core_type = #tpu.core_type<tc>, window_params = [{transform_indices = @transform_0, window_bounds = array<i64: 1, 128>}, {transform_indices = @transform_1, window_bounds = array<i64: 1, 128>}, {pipeline_mode = #tpu.pipeline_mode<synchronous>, transform_indices = @transform_2, window_bounds = array<i64: 32, 2>}, {pipeline_mode = #tpu.pipeline_mode<synchronous>, transform_indices = @transform_3, window_bounds = array<i64: 32, 1>}, {pipeline_mode = #tpu.pipeline_mode<synchronous>, transform_indices = @transform_4, window_bounds = array<i64: 32, 32>}, {pipeline_mode = #tpu.pipeline_mode<synchronous>, transform_indices = @transform_5, window_bounds = array<i64: 32, 1>}, {pipeline_mode = #tpu.pipeline_mode<synchronous>, transform_indices = @transform_6, window_bounds = array<i64: 32, 32>}, {pipeline_mode = #tpu.pipeline_mode<synchronous>, transform_indices = @transform_7, window_bounds = array<i64: 32, 1>}, {pipeline_mode = #tpu.pipeline_mode<synchronous>, transform_indices = @transform_8, window_bounds = array<i64: 1, 32>}, {pipeline_mode = #tpu.pipeline_mode<synchronous>, transform_indices = @transform_9, window_bounds = array<i64: 1, 1>}, {transform_indices = @transform_10, window_bounds = array<i64: 1, 128>}]} {
    %c0 = arith.constant 0 : index
    %c0_0 = arith.constant 0 : index
    %0 = vector.load %arg1[%c0, %c0_0] : memref<1x128xf32, #tpu.memory_space<vmem>>, vector<1x128xf32>
    %c0_1 = arith.constant 0 : index
    %c0_2 = arith.constant 0 : index
    %1 = vector.load %arg2[%c0_1, %c0_2] : memref<1x128xf32, #tpu.memory_space<vmem>>, vector<1x128xf32>
    %c0_3 = arith.constant 0 : index
    %c0_4 = arith.constant 0 : index
    %2 = vector.load %arg3[%c0_3, %c0_4] : memref<32x2xf32, #tpu.memory_space<vmem>>, vector<32x2xf32>
    %3 = vector.extract_strided_slice %2 {offsets = [0, 0], sizes = [32, 1], strides = [1, 1]} : vector<32x2xf32> to vector<32x1xf32>
    %4 = vector.broadcast %3 : vector<32x1xf32> to vector<32x128xf32>
    %5 = vector.broadcast %0 : vector<1x128xf32> to vector<32x128xf32>
    %6 = arith.mulf %4, %5 : vector<32x128xf32>
    %7 = vector.extract_strided_slice %2 {offsets = [0, 1], sizes = [32, 1], strides = [1, 1]} : vector<32x2xf32> to vector<32x1xf32>
    %8 = vector.broadcast %7 : vector<32x1xf32> to vector<32x128xf32>
    %9 = vector.broadcast %1 : vector<1x128xf32> to vector<32x128xf32>
    %10 = arith.mulf %8, %9 : vector<32x128xf32>
    %11 = arith.addf %6, %10 : vector<32x128xf32>
    %c0_5 = arith.constant 0 : index
    %c0_6 = arith.constant 0 : index
    %12 = vector.load %arg4[%c0_5, %c0_6] : memref<32x1xf32, #tpu.memory_space<vmem>>, vector<32x1xf32>
    %13 = vector.broadcast %12 : vector<32x1xf32> to vector<32x128xf32>
    %14 = arith.addf %11, %13 : vector<32x128xf32>
    %15 = math.tanh %14 : vector<32x128xf32>
    %c0_7 = arith.constant 0 : index
    %c0_8 = arith.constant 0 : index
    %16 = vector.load %arg5[%c0_7, %c0_8] : memref<32x32xf32, #tpu.memory_space<vmem>>, vector<32x32xf32>
    %cst = arith.constant dense<0.000000e+00> : vector<32x128xf32>
    %17 = tpu.matmul %16, %15, %cst {dimension_numbers = #tpu.dot_dimension_numbers<[1], [0], [0], [1], [0, 0, 1, 1], [], []>} : vector<32x32xf32>, vector<32x128xf32>, vector<32x128xf32> -> vector<32x128xf32>
    %c0_9 = arith.constant 0 : index
    %c0_10 = arith.constant 0 : index
    %18 = vector.load %arg6[%c0_9, %c0_10] : memref<32x1xf32, #tpu.memory_space<vmem>>, vector<32x1xf32>
    %19 = vector.broadcast %18 : vector<32x1xf32> to vector<32x128xf32>
    %20 = arith.addf %17, %19 : vector<32x128xf32>
    %21 = math.tanh %20 : vector<32x128xf32>
    %c0_11 = arith.constant 0 : index
    %c0_12 = arith.constant 0 : index
    %22 = vector.load %arg7[%c0_11, %c0_12] : memref<32x32xf32, #tpu.memory_space<vmem>>, vector<32x32xf32>
    %cst_13 = arith.constant dense<0.000000e+00> : vector<32x128xf32>
    %23 = tpu.matmul %22, %21, %cst_13 {dimension_numbers = #tpu.dot_dimension_numbers<[1], [0], [0], [1], [0, 0, 1, 1], [], []>} : vector<32x32xf32>, vector<32x128xf32>, vector<32x128xf32> -> vector<32x128xf32>
    %c0_14 = arith.constant 0 : index
    %c0_15 = arith.constant 0 : index
    %24 = vector.load %arg8[%c0_14, %c0_15] : memref<32x1xf32, #tpu.memory_space<vmem>>, vector<32x1xf32>
    %25 = vector.broadcast %24 : vector<32x1xf32> to vector<32x128xf32>
    %26 = arith.addf %23, %25 : vector<32x128xf32>
    %27 = math.tanh %26 : vector<32x128xf32>
    %c0_16 = arith.constant 0 : index
    %c0_17 = arith.constant 0 : index
    %28 = vector.load %arg9[%c0_16, %c0_17] : memref<1x32xf32, #tpu.memory_space<vmem>>, vector<1x32xf32>
    %cst_18 = arith.constant dense<0.000000e+00> : vector<1x128xf32>
    %29 = tpu.matmul %28, %27, %cst_18 {dimension_numbers = #tpu.dot_dimension_numbers<[1], [0], [0], [1], [0, 0, 1, 1], [], []>} : vector<1x32xf32>, vector<32x128xf32>, vector<1x128xf32> -> vector<1x128xf32>
    %c0_19 = arith.constant 0 : index
    %c0_20 = arith.constant 0 : index
    %30 = vector.load %arg10[%c0_19, %c0_20] : memref<1x1xf32, #tpu.memory_space<vmem>>, vector<1x1xf32>
    %31 = vector.broadcast %30 : vector<1x1xf32> to vector<1x128xf32>
    %32 = arith.addf %29, %31 : vector<1x128xf32>
    %cst_21 = arith.constant 2.000000e+01 : f32
    %33 = vector.broadcast %cst_21 : f32 to vector<1x128xf32>
    %34 = arith.cmpf ogt, %32, %33 : vector<1x128xf32>
    %cst_22 = arith.constant 2.000000e+01 : f32
    %35 = vector.broadcast %cst_22 : f32 to vector<1x128xf32>
    %36 = arith.minimumf %32, %35 : vector<1x128xf32>
    %37 = math.exp %36 : vector<1x128xf32>
    %38 = math.log1p %37 : vector<1x128xf32>
    %39 = arith.select %34, %32, %38 : vector<1x128xi1>, vector<1x128xf32>
    %c0_23 = arith.constant 0 : index
    %c0_24 = arith.constant 0 : index
    %40 = vector.load %arg11[%c0_23, %c0_24] : memref<1x128xf32, #tpu.memory_space<vmem>>, vector<1x128xf32>
    tpu.vector_store %arg11[%c0_23, %c0_24], %39 {strides = array<i32>} : memref<1x128xf32, #tpu.memory_space<vmem>>, vector<1x128xf32>,
    return
  }
  func.func @transform_0(%arg0: i32) -> (i32, i32) {
    %c0_i32 = arith.constant 0 : i32
    %c0_i32_0 = arith.constant 0 : i32
    return %c0_i32, %arg0 : i32, i32
  }
  func.func @transform_1(%arg0: i32) -> (i32, i32) {
    %c0_i32 = arith.constant 0 : i32
    %c0_i32_0 = arith.constant 0 : i32
    return %c0_i32, %arg0 : i32, i32
  }
  func.func @transform_2(%arg0: i32) -> (i32, i32) {
    %c0_i32 = arith.constant 0 : i32
    %c0_i32_0 = arith.constant 0 : i32
    %c0_i32_1 = arith.constant 0 : i32
    return %c0_i32, %c0_i32_0 : i32, i32
  }
  func.func @transform_3(%arg0: i32) -> (i32, i32) {
    %c0_i32 = arith.constant 0 : i32
    %c0_i32_0 = arith.constant 0 : i32
    %c0_i32_1 = arith.constant 0 : i32
    return %c0_i32, %c0_i32_0 : i32, i32
  }
  func.func @transform_4(%arg0: i32) -> (i32, i32) {
    %c0_i32 = arith.constant 0 : i32
    %c0_i32_0 = arith.constant 0 : i32
    %c0_i32_1 = arith.constant 0 : i32
    return %c0_i32, %c0_i32_0 : i32, i32
  }
  func.func @transform_5(%arg0: i32) -> (i32, i32) {
    %c0_i32 = arith.constant 0 : i32
    %c0_i32_0 = arith.constant 0 : i32
    %c0_i32_1 = arith.constant 0 : i32
    return %c0_i32, %c0_i32_0 : i32, i32
  }
  func.func @transform_6(%arg0: i32) -> (i32, i32) {
    %c0_i32 = arith.constant 0 : i32
    %c0_i32_0 = arith.constant 0 : i32
    %c0_i32_1 = arith.constant 0 : i32
    return %c0_i32, %c0_i32_0 : i32, i32
  }
  func.func @transform_7(%arg0: i32) -> (i32, i32) {
    %c0_i32 = arith.constant 0 : i32
    %c0_i32_0 = arith.constant 0 : i32
    %c0_i32_1 = arith.constant 0 : i32
    return %c0_i32, %c0_i32_0 : i32, i32
  }
  func.func @transform_8(%arg0: i32) -> (i32, i32) {
    %c0_i32 = arith.constant 0 : i32
    %c0_i32_0 = arith.constant 0 : i32
    %c0_i32_1 = arith.constant 0 : i32
    return %c0_i32, %c0_i32_0 : i32, i32
  }
  func.func @transform_9(%arg0: i32) -> (i32, i32) {
    %c0_i32 = arith.constant 0 : i32
    %c0_i32_0 = arith.constant 0 : i32
    %c0_i32_1 = arith.constant 0 : i32
    return %c0_i32, %c0_i32_0 : i32, i32
  }
  func.func @transform_10(%arg0: i32) -> (i32, i32) {
    %c0_i32 = arith.constant 0 : i32
    %c0_i32_0 = arith.constant 0 : i32
    return %c0_i32, %arg0 : i32, i32
  }
}

</mosaic_0001>

<llo_original>
// kernel: tpu_custom_call.1
$region0: #{tpu_custom_call.1}
  #allocation0 [shape = 'u32[]', space=smem, size = 0x4, offset = 0x4, fixed_abs, tag = 'smem constant byte address 0x4 - core index']
  #allocation1 [shape = 'u32[144,128]{1,0:T(1,128)}', space=vmem, size = 0x12000, scoped, tag = 'internal scratch']
  #allocation2 [shape = 'f32[1,1]{1,0:T(1,128)S(1)}', space=vmem, size = 0x200, scoped, tag = 'scoped memory for tpu_custom_call.1']
  %s0 = inlined_call_operand.vmem [shape: f32[1,128], index: 0, kind: input, shape index: {}]
  %s1 = inlined_call_operand.vmem [shape: f32[1,128], index: 1, kind: input, shape index: {}]
  %s2 = inlined_call_operand.vmem [shape: f32[32,2], index: 2, kind: input, shape index: {}]
  %s3 = inlined_call_operand.vmem [shape: f32[32,1], index: 3, kind: input, shape index: {}]
  %s4 = inlined_call_operand.vmem [shape: f32[32,32], index: 4, kind: input, shape index: {}]
  %s5 = inlined_call_operand.vmem [shape: f32[32,1], index: 5, kind: input, shape index: {}]
  %s6 = inlined_call_operand.vmem [shape: f32[32,32], index: 6, kind: input, shape index: {}]
  %s7 = inlined_call_operand.vmem [shape: f32[32,1], index: 7, kind: input, shape index: {}]
  %s8 = inlined_call_operand.vmem [shape: f32[1,32], index: 8, kind: input, shape index: {}]
  %s9 = inlined_call_operand.<no memory space> [shape: f32[1,1], index: 9, kind: input, shape index: {}]
  %s10 = inlined_call_operand.hbm [shape: f32[1,128], index: 10, kind: output, shape index: {}]
  %s11 = sld [smem:[#allocation0]]
  $region50: #{tpu_custom_call.1} parent=0
    _
  %s13 = ssub.s32 1, %s11
  %s14 = scalar_select 0, %s13, %s11
  %v15 = vstv %s9
  %16 = vst [vmem:[#allocation2] sm:$0x1] %v15
  $region1: #{tpu_custom_call.1} parent=0
    #allocation3 [shape = 'u8[512]{0}', space=vmem, size = 0x400, scoped, tag = 'output window, operand 0, single buffered']
    #allocation4 [shape = 's32[1]{0}', space=sflag, size = 0x4, scoped, tag = 'scoped memory for tpu_custom_call.1']
    %17 = vsyncpa [#allocation4], 0
    // Predicated region
    $region2: #{tpu_custom_call.1} parent=1 // pred_check
      _
    $region3: #{tpu_custom_call.1} parent=1 // pred_check_branch
      %19 = sbr.rel (0) target = $region5
    $region4: #{tpu_custom_call.1} parent=1 // pred_region
      _
    $region5: #{tpu_custom_call.1} parent=1 // pred_fallthru
      _
    // Predicated region
    $region6: #{tpu_custom_call.1} parent=1 // pred_check
      _
    $region7: #{tpu_custom_call.1} parent=1 // pred_check_branch
      %21 = sbr.rel (0) target = $region9
    $region8: #{tpu_custom_call.1} parent=1 // pred_region
      _
    $region9: #{tpu_custom_call.1} parent=1 // pred_fallthru
      _
    // Predicated region
    $region10: #{tpu_custom_call.1} parent=1 // pred_check
      _
    $region11: #{tpu_custom_call.1} parent=1 // pred_check_branch
      %23 = sbr.rel (0) target = $region13
    $region12: #{tpu_custom_call.1} parent=1 // pred_region
      _
    $region13: #{tpu_custom_call.1} parent=1 // pred_fallthru
      _
    // Predicated region
    $region14: #{tpu_custom_call.1} parent=1 // pred_check
      _
    $region15: #{tpu_custom_call.1} parent=1 // pred_check_branch
      %25 = sbr.rel (0) target = $region17
    $region16: #{tpu_custom_call.1} parent=1 // pred_region
      _
    $region17: #{tpu_custom_call.1} parent=1 // pred_fallthru
      _
    // Predicated region
    $region18: #{tpu_custom_call.1} parent=1 // pred_check
      _
    $region19: #{tpu_custom_call.1} parent=1 // pred_check_branch
      %27 = sbr.rel (0) target = $region21
    $region20: #{tpu_custom_call.1} parent=1 // pred_region
      _
    $region21: #{tpu_custom_call.1} parent=1 // pred_fallthru
      _
    // Predicated region
    $region22: #{tpu_custom_call.1} parent=1 // pred_check
      _
    $region23: #{tpu_custom_call.1} parent=1 // pred_check_branch
      %29 = sbr.rel (0) target = $region25
    $region24: #{tpu_custom_call.1} parent=1 // pred_region
      _
    $region25: #{tpu_custom_call.1} parent=1 // pred_fallthru
      _
    // Predicated region
    $region26: #{tpu_custom_call.1} parent=1 // pred_check
      _
    $region27: #{tpu_custom_call.1} parent=1 // pred_check_branch
      %31 = sbr.rel (0) target = $region29
    $region28: #{tpu_custom_call.1} parent=1 // pred_region
      _
    $region29: #{tpu_custom_call.1} parent=1 // pred_fallthru
      _
    // Predicated region
    $region30: #{tpu_custom_call.1} parent=1 // pred_check
      _
    $region31: #{tpu_custom_call.1} parent=1 // pred_check_branch
      %33 = sbr.rel (0) target = $region33
    $region32: #{tpu_custom_call.1} parent=1 // pred_region
      _
    $region33: #{tpu_custom_call.1} parent=1 // pred_fallthru
      _
    // Predicated region
    $region34: #{tpu_custom_call.1} parent=1 // pred_check
      _
    $region35: #{tpu_custom_call.1} parent=1 // pred_check_branch
      %35 = sbr.rel (0) target = $region37
    $region36: #{tpu_custom_call.1} parent=1 // pred_region
      _
    $region37: #{tpu_custom_call.1} parent=1 // pred_fallthru
      _
    // Predicated region
    $region38: #{tpu_custom_call.1} parent=1 // pred_check
      _
    $region39: #{tpu_custom_call.1} parent=1 // pred_check_branch
      %37 = sbr.rel (0) target = $region41
    $region40: #{tpu_custom_call.1} parent=1 // pred_region
      _
    $region41: #{tpu_custom_call.1} parent=1 // pred_fallthru
      _
    %v38 = vld [vmem:[%s0] sm:$0x1]
    %v39 = vld [vmem:[%s1] sm:$0x1]
    %v40 = vld [vmem:[%s2] sm:$0xff]
    %v41 = vld [vmem:[%s2 + $0x8] sm:$0xff]
    %v42 = vld [vmem:[%s2 + $0x10] sm:$0xff]
    %v43 = vld [vmem:[%s2 + $0x18] sm:$0xff]
    %45 = vset.pattern.permute.xlu0 0
    %46 = vperm.xlu0 %45, %v40
    %v47 = vpop.permute.xlu0 %46
    %50 = vset.pattern.permute.xlu0 0
    %51 = vperm.xlu0 %50, %v41
    %v52 = vpop.permute.xlu0 %51
    %55 = vset.pattern.permute.xlu0 0
    %56 = vperm.xlu0 %55, %v42
    %v57 = vpop.permute.xlu0 %56
    %60 = vset.pattern.permute.xlu0 0
    %61 = vperm.xlu0 %60, %v43
    %v62 = vpop.permute.xlu0 %61
    %v65 = vlaneseq
    %v66 = vshrl.u32 %v65, 7
    %v67 = vsub.s32 0, %v66
    %v68 = vrot.slane %v38, %v67
    %v70 = vmul.f32 %v47, %v68
    %v71 = vmul.f32 %v52, %v68
    %v72 = vmul.f32 %v57, %v68
    %v73 = vmul.f32 %v62, %v68
    %74 = vset.pattern.permute.xlu0 1
    %75 = vperm.xlu0 %74, %v40
    %v76 = vpop.permute.xlu0 %75
    %78 = vset.pattern.permute.xlu0 1
    %79 = vperm.xlu0 %78, %v41
    %v80 = vpop.permute.xlu0 %79
    %82 = vset.pattern.permute.xlu0 1
    %83 = vperm.xlu0 %82, %v42
    %v84 = vpop.permute.xlu0 %83
    %86 = vset.pattern.permute.xlu0 1
    %87 = vperm.xlu0 %86, %v43
    %v88 = vpop.permute.xlu0 %87
    %v91 = vlaneseq
    %v92 = vshrl.u32 %v91, 7
    %v93 = vsub.s32 0, %v92
    %v94 = vrot.slane %v39, %v93
    %v96 = vmul.f32 %v76, %v94
    %v97 = vmul.f32 %v80, %v94
    %v98 = vmul.f32 %v84, %v94
    %v99 = vmul.f32 %v88, %v94
    %v100 = vadd.f32 %v70, %v96
    %v101 = vadd.f32 %v71, %v97
    %v102 = vadd.f32 %v72, %v98
    %v103 = vadd.f32 %v73, %v99
    %v104 = vld [vmem:[%s3] sm:$0xff]
    %v105 = vld [vmem:[%s3 + $0x8] sm:$0xff]
    %v106 = vld [vmem:[%s3 + $0x10] sm:$0xff]
    %v107 = vld [vmem:[%s3 + $0x18] sm:$0xff]
    %109 = vset.pattern.permute.xlu0 0
    %110 = vperm.xlu0 %109, %v104
    %v111 = vpop.permute.xlu0 %110
    %114 = vset.pattern.permute.xlu0 0
    %115 = vperm.xlu0 %114, %v105
    %v116 = vpop.permute.xlu0 %115
    %119 = vset.pattern.permute.xlu0 0
    %120 = vperm.xlu0 %119, %v106
    %v121 = vpop.permute.xlu0 %120
    %124 = vset.pattern.permute.xlu0 0
    %125 = vperm.xlu0 %124, %v107
    %v126 = vpop.permute.xlu0 %125
    %v128 = vadd.f32 %v100, %v111
    %v129 = vadd.f32 %v101, %v116
    %v130 = vadd.f32 %v102, %v121
    %v131 = vadd.f32 %v103, %v126
    %v132 = vtanh.pop %v128
    %v133 = vtanh.pop %v129
    %v134 = vtanh.pop %v130
    %v135 = vtanh.pop %v131
    %v136 = vld [vmem:[%s4] sm:$0xff]
    %v137 = vld [vmem:[%s4 + $0x8] sm:$0xff]
    %v138 = vld [vmem:[%s4 + $0x10] sm:$0xff]
    %v139 = vld [vmem:[%s4 + $0x18] sm:$0xff]
    %v140 = vld [vmem:[%s5] sm:$0xff]
    %v141 = vld [vmem:[%s5 + $0x8] sm:$0xff]
    %v142 = vld [vmem:[%s5 + $0x10] sm:$0xff]
    %v143 = vld [vmem:[%s5 + $0x18] sm:$0xff]
    %145 = vset.pattern.permute.xlu0 0
    %146 = vperm.xlu0 %145, %v140
    %v147 = vpop.permute.xlu0 %146
    %150 = vset.pattern.permute.xlu0 0
    %151 = vperm.xlu0 %150, %v141
    %v152 = vpop.permute.xlu0 %151
    %155 = vset.pattern.permute.xlu0 0
    %156 = vperm.xlu0 %155, %v142
    %v157 = vpop.permute.xlu0 %156
    %160 = vset.pattern.permute.xlu0 0
    %161 = vperm.xlu0 %160, %v143
    %v162 = vpop.permute.xlu0 %161
    %vm164 = vcmask 261120
    %v166 = vsel %vm164, %v136, 0
    %v169 = vsel %vm164, %v137, 0
    %v172 = vsel %vm164, %v138, 0
    %v175 = vsel %vm164, %v139, 0
    %177 = vmatprep.subr.mxu0 0.0
    %178 = vmatpush1.msra.mxu0 %v132
    %179 = vmatprep.subr.mxu0 0.0
    %180 = vmatpush1.msra.mxu0 %v133
    %181 = vmatprep.subr.mxu0 0.0
    %182 = vmatpush1.msra.mxu0 %v134
    %183 = vmatprep.subr.mxu0 0.0
    %184 = vmatpush1.msra.mxu0 %v135
    %185 = vmatprep.subr.mxu0 0.0
    %186 = vmatpush1.msra.mxu0 0.0
    %187 = vmatprep.subr.mxu0 0.0
    %188 = vmatpush1.msra.mxu0 0.0
    %189 = vmatprep.subr.mxu0 0.0
    %190 = vmatpush1.msra.mxu0 0.0
    %191 = vmatprep.subr.mxu0 0.0
    %192 = vmatpush1.msra.mxu0 0.0
    %193 = vmatprep.subr.mxu0 0.0
    %194 = vmatpush1.msra.mxu0 0.0
    %195 = vmatprep.subr.mxu0 0.0
    %196 = vmatpush1.msra.mxu0 0.0
    %197 = vmatprep.subr.mxu0 0.0
    %198 = vmatpush1.msra.mxu0 0.0
    %199 = vmatprep.subr.mxu0 0.0
    %200 = vmatpush1.msra.mxu0 0.0
    %201 = vmatprep.subr.mxu0 0.0
    %202 = vmatpush1.msra.mxu0 0.0
    %203 = vmatprep.subr.mxu0 0.0
    %204 = vmatpush1.msra.mxu0 0.0
    %205 = vmatprep.subr.mxu0 0.0
    %206 = vmatpush1.msra.mxu0 0.0
    %207 = vmatprep.subr.mxu0 0.0
    %208 = vmatpush1.msra.mxu0 0.0
    %209 = vmatprep.subr.mxu0 0.0
    %210 = vmatpush1.msra.mxu0 0.0
    %211 = vmatprep.subr.mxu0 0.0
    %212 = vmatpush1.msra.mxu0 0.0
    %213 = vmatprep.subr.mxu0 0.0
    %214 = vmatpush1.msra.mxu0 0.0
    %215 = vmatprep.subr.mxu0 0.0
    %216 = vmatpush1.msra.mxu0 0.0
    %217 = vmatprep.subr.mxu0 0.0
    %218 = vmatpush1.msra.mxu0 0.0
    %219 = vmatprep.subr.mxu0 0.0
    %220 = vmatpush1.msra.mxu0 0.0
    %221 = vmatprep.subr.mxu0 0.0
    %222 = vmatpush1.msra.mxu0 0.0
    %223 = vmatprep.subr.mxu0 0.0
    %224 = vmatpush1.msra.mxu0 0.0
    %225 = vmatprep.subr.mxu0 0.0
    %226 = vmatpush1.msra.mxu0 0.0
    %227 = vmatprep.subr.mxu0 0.0
    %228 = vmatpush1.msra.mxu0 0.0
    %229 = vmatprep.subr.mxu0 0.0
    %230 = vmatpush1.msra.mxu0 0.0
    %231 = vmatprep.subr.mxu0 0.0
    %232 = vmatpush1.msra.mxu0 0.0
    %233 = vmatprep.subr.mxu0 0.0
    %234 = vmatpush1.msra.mxu0 0.0
    %235 = vmatprep.subr.mxu0 0.0
    %236 = vmatpush1.msra.mxu0 0.0
    %237 = vmatprep.subr.mxu0 0.0
    %238 = vmatpush1.msra.mxu0 0.0
    %239 = vmatprep.subr.mxu0 0.0
    %240 = vmatpush1.msra.mxu0 0.0
    %241 = vmatprep.mubr.f32.mxu0 0.0
    %242 = vmatmul.mubr.f32.gmra.mrb[0].mxu0 %v166
    %v243 = vpop.f32.mrb[0].mxu0
    %v244 = vadd.f32 %v147, %v243
    %v245 = vpop.f32.mrb[0].mxu0
    %246 = vmatprep.mubr.f32.mxu0 0.0
    %247 = vmatmul.mubr.f32.gmra.mrb[0].mxu0 %v169
    %v248 = vpop.f32.mrb[0].mxu0
    %v249 = vadd.f32 %v152, %v248
    %v250 = vpop.f32.mrb[0].mxu0
    %251 = vmatprep.mubr.f32.mxu0 0.0
    %252 = vmatmul.mubr.f32.gmra.mrb[0].mxu0 %v172
    %v253 = vpop.f32.mrb[0].mxu0
    %v254 = vadd.f32 %v157, %v253
    %v255 = vpop.f32.mrb[0].mxu0
    %256 = vmatprep.mubr.f32.mxu0 0.0
    %257 = vmatmul.mubr.f32.gmra.mrb[0].mxu0 %v175
    %v258 = vpop.f32.mrb[0].mxu0
    %v259 = vadd.f32 %v162, %v258
    %v260 = vpop.f32.mrb[0].mxu0
    %261 = vdwg.mxu0
    %v262 = vtanh.pop %v244
    %v263 = vtanh.pop %v249
    %v264 = vtanh.pop %v254
    %v265 = vtanh.pop %v259
    %v266 = vld [vmem:[%s6] sm:$0xff]
    %v267 = vld [vmem:[%s6 + $0x8] sm:$0xff]
    %v268 = vld [vmem:[%s6 + $0x10] sm:$0xff]
    %v269 = vld [vmem:[%s6 + $0x18] sm:$0xff]
    %v270 = vld [vmem:[%s7] sm:$0xff]
    %v271 = vld [vmem:[%s7 + $0x8] sm:$0xff]
    %v272 = vld [vmem:[%s7 + $0x10] sm:$0xff]
    %v273 = vld [vmem:[%s7 + $0x18] sm:$0xff]
    %275 = vset.pattern.permute.xlu0 0
    %276 = vperm.xlu0 %275, %v270
    %v277 = vpop.permute.xlu0 %276
    %280 = vset.pattern.permute.xlu0 0
    %281 = vperm.xlu0 %280, %v271
    %v282 = vpop.permute.xlu0 %281
    %285 = vset.pattern.permute.xlu0 0
    %286 = vperm.xlu0 %285, %v272
    %v287 = vpop.permute.xlu0 %286
    %290 = vset.pattern.permute.xlu0 0
    %291 = vperm.xlu0 %290, %v273
    %v292 = vpop.permute.xlu0 %291
    %v295 = vsel %vm164, %v266, 0
    %v298 = vsel %vm164, %v267, 0
    %v301 = vsel %vm164, %v268, 0
    %v304 = vsel %vm164, %v269, 0
    %306 = vmatprep.subr.mxu0 0.0
    %307 = vmatpush1.msra.mxu0 %v262
    %308 = vmatprep.subr.mxu0 0.0
    %309 = vmatpush1.msra.mxu0 %v263
    %310 = vmatprep.subr.mxu0 0.0
    %311 = vmatpush1.msra.mxu0 %v264
    %312 = vmatprep.subr.mxu0 0.0
    %313 = vmatpush1.msra.mxu0 %v265
    %314 = vmatprep.subr.mxu0 0.0
    %315 = vmatpush1.msra.mxu0 0.0
    %316 = vmatprep.subr.mxu0 0.0
    %317 = vmatpush1.msra.mxu0 0.0
    %318 = vmatprep.subr.mxu0 0.0
    %319 = vmatpush1.msra.mxu0 0.0
    %320 = vmatprep.subr.mxu0 0.0
    %321 = vmatpush1.msra.mxu0 0.0
    %322 = vmatprep.subr.mxu0 0.0
    %323 = vmatpush1.msra.mxu0 0.0
    %324 = vmatprep.subr.mxu0 0.0
    %325 = vmatpush1.msra.mxu0 0.0
    %326 = vmatprep.subr.mxu0 0.0
    %327 = vmatpush1.msra.mxu0 0.0
    %328 = vmatprep.subr.mxu0 0.0
    %329 = vmatpush1.msra.mxu0 0.0
    %330 = vmatprep.subr.mxu0 0.0
    %331 = vmatpush1.msra.mxu0 0.0
    %332 = vmatprep.subr.mxu0 0.0
    %333 = vmatpush1.msra.mxu0 0.0
    %334 = vmatprep.subr.mxu0 0.0
    %335 = vmatpush1.msra.mxu0 0.0
    %336 = vmatprep.subr.mxu0 0.0
    %337 = vmatpush1.msra.mxu0 0.0
    %338 = vmatprep.subr.mxu0 0.0
    %339 = vmatpush1.msra.mxu0 0.0
    %340 = vmatprep.subr.mxu0 0.0
    %341 = vmatpush1.msra.mxu0 0.0
    %342 = vmatprep.subr.mxu0 0.0
    %343 = vmatpush1.msra.mxu0 0.0
    %344 = vmatprep.subr.mxu0 0.0
    %345 = vmatpush1.msra.mxu0 0.0
    %346 = vmatprep.subr.mxu0 0.0
    %347 = vmatpush1.msra.mxu0 0.0
    %348 = vmatprep.subr.mxu0 0.0
    %349 = vmatpush1.msra.mxu0 0.0
    %350 = vmatprep.subr.mxu0 0.0
    %351 = vmatpush1.msra.mxu0 0.0
    %352 = vmatprep.subr.mxu0 0.0
    %353 = vmatpush1.msra.mxu0 0.0
    %354 = vmatprep.subr.mxu0 0.0
    %355 = vmatpush1.msra.mxu0 0.0
    %356 = vmatprep.subr.mxu0 0.0
    %357 = vmatpush1.msra.mxu0 0.0
    %358 = vmatprep.subr.mxu0 0.0
    %359 = vmatpush1.msra.mxu0 0.0
    %360 = vmatprep.subr.mxu0 0.0
    %361 = vmatpush1.msra.mxu0 0.0
    %362 = vmatprep.subr.mxu0 0.0
    %363 = vmatpush1.msra.mxu0 0.0
    %364 = vmatprep.subr.mxu0 0.0
    %365 = vmatpush1.msra.mxu0 0.0
    %366 = vmatprep.subr.mxu0 0.0
    %367 = vmatpush1.msra.mxu0 0.0
    %368 = vmatprep.subr.mxu0 0.0
    %369 = vmatpush1.msra.mxu0 0.0
    %370 = vmatprep.mubr.f32.mxu0 0.0
    %371 = vmatmul.mubr.f32.gmra.mrb[0].mxu0 %v295
    %v372 = vpop.f32.mrb[0].mxu0
    %v373 = vadd.f32 %v277, %v372
    %v374 = vpop.f32.mrb[0].mxu0
    %375 = vmatprep.mubr.f32.mxu0 0.0
    %376 = vmatmul.mubr.f32.gmra.mrb[0].mxu0 %v298
    %v377 = vpop.f32.mrb[0].mxu0
    %v378 = vadd.f32 %v282, %v377
    %v379 = vpop.f32.mrb[0].mxu0
    %380 = vmatprep.mubr.f32.mxu0 0.0
    %381 = vmatmul.mubr.f32.gmra.mrb[0].mxu0 %v301
    %v382 = vpop.f32.mrb[0].mxu0
    %v383 = vadd.f32 %v287, %v382
    %v384 = vpop.f32.mrb[0].mxu0
    %385 = vmatprep.mubr.f32.mxu0 0.0
    %386 = vmatmul.mubr.f32.gmra.mrb[0].mxu0 %v304
    %v387 = vpop.f32.mrb[0].mxu0
    %v388 = vadd.f32 %v292, %v387
    %v389 = vpop.f32.mrb[0].mxu0
    %390 = vdwg.mxu0
    %v391 = vtanh.pop %v373
    %v392 = vtanh.pop %v378
    %v393 = vtanh.pop %v383
    %v394 = vtanh.pop %v388
    %v395 = vld [vmem:[%s8] sm:$0x1]
    %v396 = vld [vmem:[#allocation2] sm:$0x1]
    %398 = vset.pattern.permute.xlu0 0
    %399 = vperm.xlu0 %398, %v396
    %v400 = vpop.permute.xlu0 %399
    %v402 = vlaneseq
    %v403 = vshrl.u32 %v402, 7
    %v404 = vsub.s32 0, %v403
    %v405 = vrot.slane %v400, %v404
    %v407 = vsel %vm164, %v395, 0
    %409 = vmatprep.subr.mxu0 0.0
    %410 = vmatpush1.msra.mxu0 %v391
    %411 = vmatprep.subr.mxu0 0.0
    %412 = vmatpush1.msra.mxu0 %v392
    %413 = vmatprep.subr.mxu0 0.0
    %414 = vmatpush1.msra.mxu0 %v393
    %415 = vmatprep.subr.mxu0 0.0
    %416 = vmatpush1.msra.mxu0 %v394
    %417 = vmatprep.subr.mxu0 0.0
    %418 = vmatpush1.msra.mxu0 0.0
    %419 = vmatprep.subr.mxu0 0.0
    %420 = vmatpush1.msra.mxu0 0.0
    %421 = vmatprep.subr.mxu0 0.0
    %422 = vmatpush1.msra.mxu0 0.0
    %423 = vmatprep.subr.mxu0 0.0
    %424 = vmatpush1.msra.mxu0 0.0
    %425 = vmatprep.subr.mxu0 0.0
    %426 = vmatpush1.msra.mxu0 0.0
    %427 = vmatprep.subr.mxu0 0.0
    %428 = vmatpush1.msra.mxu0 0.0
    %429 = vmatprep.subr.mxu0 0.0
    %430 = vmatpush1.msra.mxu0 0.0
    %431 = vmatprep.subr.mxu0 0.0
    %432 = vmatpush1.msra.mxu0 0.0
    %433 = vmatprep.subr.mxu0 0.0
    %434 = vmatpush1.msra.mxu0 0.0
    %435 = vmatprep.subr.mxu0 0.0
    %436 = vmatpush1.msra.mxu0 0.0
    %437 = vmatprep.subr.mxu0 0.0
    %438 = vmatpush1.msra.mxu0 0.0
    %439 = vmatprep.subr.mxu0 0.0
    %440 = vmatpush1.msra.mxu0 0.0
    %441 = vmatprep.subr.mxu0 0.0
    %442 = vmatpush1.msra.mxu0 0.0
    %443 = vmatprep.subr.mxu0 0.0
    %444 = vmatpush1.msra.mxu0 0.0
    %445 = vmatprep.subr.mxu0 0.0
    %446 = vmatpush1.msra.mxu0 0.0
    %447 = vmatprep.subr.mxu0 0.0
    %448 = vmatpush1.msra.mxu0 0.0
    %449 = vmatprep.subr.mxu0 0.0
    %450 = vmatpush1.msra.mxu0 0.0
    %451 = vmatprep.subr.mxu0 0.0
    %452 = vmatpush1.msra.mxu0 0.0
    %453 = vmatprep.subr.mxu0 0.0
    %454 = vmatpush1.msra.mxu0 0.0
    %455 = vmatprep.subr.mxu0 0.0
    %456 = vmatpush1.msra.mxu0 0.0
    %457 = vmatprep.subr.mxu0 0.0
    %458 = vmatpush1.msra.mxu0 0.0
    %459 = vmatprep.subr.mxu0 0.0
    %460 = vmatpush1.msra.mxu0 0.0
    %461 = vmatprep.subr.mxu0 0.0
    %462 = vmatpush1.msra.mxu0 0.0
    %463 = vmatprep.subr.mxu0 0.0
    %464 = vmatpush1.msra.mxu0 0.0
    %465 = vmatprep.subr.mxu0 0.0
    %466 = vmatpush1.msra.mxu0 0.0
    %467 = vmatprep.subr.mxu0 0.0
    %468 = vmatpush1.msra.mxu0 0.0
    %469 = vmatprep.subr.mxu0 0.0
    %470 = vmatpush1.msra.mxu0 0.0
    %471 = vmatprep.subr.mxu0 0.0
    %472 = vmatpush1.msra.mxu0 0.0
    %473 = vmatprep.mubr.f32.mxu0 0.0
    %474 = vmatmul.mubr.f32.gmra.mrb[0].mxu0 %v407
    %v475 = vpop.f32.mrb[0].mxu0
    %v476 = vadd.f32 %v405, %v475
    %v477 = vpop.f32.mrb[0].mxu0
    %478 = vdwg.mxu0
    %vm479 = vcmp.gt.f32.partialorder %v476, 20.0
    %v480 = vmin.f32 %v476, 20.0
    %v481 = vmul.f32 %v480, 1.442695
    %v482 = vpow.pop %v481
    %v483 = vadd.f32 %v482, 1.0
    %v484 = vlog2.pop %v483
    %v485 = vmul.f32 %v484, 0.6931472
    %v486 = vmul.f32 -0.5, %v482
    %v487 = vadd.f32 %v486, 1.0
    %v488 = vmul.f32 %v487, %v482
    %v489 = vand.u32 2147483647, %v482
    %vm490 = vcmp.lt.f32.partialorder %v489, 0.0004427343
    %v491 = vsel %vm490, %v488, %v485
    %v492 = vsel %vm479, %v476, %v491
    %493 = vst [vmem:[#allocation3] sm:$0x1] %v492
    // Predicated region
    $region42: #{tpu_custom_call.1} parent=1 // pred_check
      _
    $region43: #{tpu_custom_call.1} parent=1 // pred_check_branch
      %495 = sbr.rel (0) target = $region45
    $region44: #{tpu_custom_call.1} parent=1 // pred_region
      %s497 = ssub.s32 16, 16
      %498 = vsyncadd [#allocation4], %s497
      %s500 = sshll.u32 [#allocation3], 4
      %s501 = int_to_ptr.vmem [resolvable:$true] %s500
      %503 = dma.vmem_to_hbm [thread:$0]  %s501, 16, %s10, [#allocation4]
    $region45: #{tpu_custom_call.1} parent=1 // pred_fallthru
      _
    // Predicated region
    $region46: #{tpu_custom_call.1} parent=1 // pred_check
      _
    $region47: #{tpu_custom_call.1} parent=1 // pred_check_branch
      %505 = sbr.rel (0) target = $region49
    $region48: #{tpu_custom_call.1} parent=1 // pred_region
      %506 = dma.done [#allocation4], 16
    $region49: #{tpu_custom_call.1} parent=1 // pred_fallthru
      _
    %507 = vsyncpa [#allocation4], 1

</llo_original>
